<compile_context>
chip_gen: v6e
topology: v6e:2x2x1
jax: 0.10.0
libtpu: 0.0.40
codegen_flags: <defaults>
</compile_context>

<pallas_src>
import jax
import jax.numpy as jnp
from jax.experimental import pallas as pl
from jax.experimental.pallas import tpu as pltpu

# Original problem sizes (torch.nn.Linear(3, 5), x1: (1,3), x2: (1,5))
BATCH = 1
IN_F = 3
OUT_F = 5


def _linear_add_relu_kernel(x1_ref, wb_ref, x2_ref, o_ref):
    # x1_ref: (B, IN_F)        in SMEM (scalar reads, B == 1)
    # wb_ref: (IN_F+1, OUT_F)  in VMEM; rows 0..IN_F-1 = W^T, row IN_F = bias
    # x2_ref: (B, OUT_F)       in VMEM
    # o_ref:  (B, OUT_F)       in VMEM
    y = wb_ref[IN_F:IN_F + 1, :] + x2_ref[...]        # bias + residual, (1, OUT_F)
    # K = IN_F contraction as scalar-broadcast multiply-adds on the VPU,
    # reading each weight row directly from the ref (tiny vlds, spare slots).
    for k in range(IN_F):
        y = y + x1_ref[0, k] * wb_ref[k:k + 1, :]
    o_ref[...] = jnp.maximum(y, 0.0)                  # f32 end-to-end, no cast


def _linear_add_relu_call(x1, wb, x2):
    B = x1.shape[0]
    return pl.pallas_call(
        _linear_add_relu_kernel,
        out_shape=jax.ShapeDtypeStruct((B, OUT_F), jnp.float32),
        in_specs=[
            pl.BlockSpec(memory_space=pltpu.MemorySpace.SMEM),   # x1 scalars
            pl.BlockSpec(memory_space=pltpu.MemorySpace.VMEM),   # packed [W^T; b]
            pl.BlockSpec(memory_space=pltpu.MemorySpace.VMEM),   # x2
        ],
        out_specs=pl.BlockSpec(memory_space=pltpu.MemorySpace.VMEM),
    )(x1, wb, x2)


@jax.jit
def linear_add_relu(x1, wb, x2):
    """x1: (1, IN_F), wb: (IN_F+1, OUT_F) packed [W^T; bias], x2: (1, OUT_F)."""
    assert x1.shape[0] == 1, "kernel reads x1 as scalars; only B == 1 is supported"
    return _linear_add_relu_call(x1, wb, x2)


def pack_params(w, b):
    """Pack once at setup: w (OUT_F, IN_F) torch layout, b (OUT_F,) -> (IN_F+1, OUT_F)."""
    return jnp.concatenate([w.T, b.reshape(1, OUT_F)], axis=0)


def init_linear_params(key, in_f, out_f):
    # Match torch.nn.Linear default init: U(-1/sqrt(in_f), 1/sqrt(in_f))
    k_w, k_b = jax.random.split(key)
    bound = 1.0 / jnp.sqrt(jnp.float32(in_f))
    w = jax.random.uniform(k_w, (out_f, in_f), jnp.float32, -bound, bound)
    b = jax.random.uniform(k_b, (out_f,), jnp.float32, -bound, bound)
    return w, b


if __name__ == "__main__":
    key = jax.random.PRNGKey(0)
    k_param, k_x1, k_x2 = jax.random.split(key, 3)

    w, b = init_linear_params(k_param, IN_F, OUT_F)            # w: (5, 3), b: (5,)
    wb = pack_params(w, b)                                     # (4, 5), packed once
    x1 = jax.random.normal(k_x1, (BATCH, IN_F), jnp.float32)   # (1, 3)
    x2 = jax.random.normal(k_x2, (BATCH, OUT_F), jnp.float32)  # (1, 5)

    out = linear_add_relu(x1, wb, x2)
    out = jax.block_until_ready(out)

    # Reference check in plain JAX
    ref = jnp.maximum(x1 @ w.T + b + x2, 0.0)
    assert out.shape == (BATCH, OUT_F)
    assert jnp.allclose(out, ref, atol=1e-5, rtol=1e-5)

    print("KERNEL_OK")
</pallas_src>

<mosaic_0001>
module attributes {stable_mosaic.version = 11 : i64} {
  func.func @_linear_add_relu_kernel(%arg0: memref<1x3xf32, #tpu.memory_space<smem>>, %arg1: memref<4x5xf32, #tpu.memory_space<vmem>>, %arg2: memref<1x5xf32, #tpu.memory_space<vmem>>, %arg3: memref<1x5xf32, #tpu.memory_space<vmem>>) attributes {dimension_semantics = [], scalar_prefetch = 0 : i64, scratch_operands = 0 : i64, tpu.core_type = #tpu.core_type<tc>} {
    %c3 = arith.constant 3 : index
    %c0 = arith.constant 0 : index
    %0 = vector.load %arg1[%c3, %c0] : memref<4x5xf32, #tpu.memory_space<vmem>>, vector<1x5xf32>
    %c0_0 = arith.constant 0 : index
    %c0_1 = arith.constant 0 : index
    %1 = vector.load %arg2[%c0_0, %c0_1] : memref<1x5xf32, #tpu.memory_space<vmem>>, vector<1x5xf32>
    %2 = arith.addf %0, %1 : vector<1x5xf32>
    %c0_2 = arith.constant 0 : index
    %c0_3 = arith.constant 0 : index
    %3 = memref.load %arg0[%c0_2, %c0_3] : memref<1x3xf32, #tpu.memory_space<smem>>
    %c0_4 = arith.constant 0 : index
    %c0_5 = arith.constant 0 : index
    %4 = vector.load %arg1[%c0_4, %c0_5] : memref<4x5xf32, #tpu.memory_space<vmem>>, vector<1x5xf32>
    %5 = vector.broadcast %3 : f32 to vector<1x5xf32>
    %6 = arith.mulf %5, %4 : vector<1x5xf32>
    %7 = arith.addf %2, %6 : vector<1x5xf32>
    %c0_6 = arith.constant 0 : index
    %c1 = arith.constant 1 : index
    %8 = memref.load %arg0[%c0_6, %c1] : memref<1x3xf32, #tpu.memory_space<smem>>
    %c1_7 = arith.constant 1 : index
    %c0_8 = arith.constant 0 : index
    %9 = vector.load %arg1[%c1_7, %c0_8] : memref<4x5xf32, #tpu.memory_space<vmem>>, vector<1x5xf32>
    %10 = vector.broadcast %8 : f32 to vector<1x5xf32>
    %11 = arith.mulf %10, %9 : vector<1x5xf32>
    %12 = arith.addf %7, %11 : vector<1x5xf32>
    %c0_9 = arith.constant 0 : index
    %c2 = arith.constant 2 : index
    %13 = memref.load %arg0[%c0_9, %c2] : memref<1x3xf32, #tpu.memory_space<smem>>
    %c2_10 = arith.constant 2 : index
    %c0_11 = arith.constant 0 : index
    %14 = vector.load %arg1[%c2_10, %c0_11] : memref<4x5xf32, #tpu.memory_space<vmem>>, vector<1x5xf32>
    %15 = vector.broadcast %13 : f32 to vector<1x5xf32>
    %16 = arith.mulf %15, %14 : vector<1x5xf32>
    %17 = arith.addf %12, %16 : vector<1x5xf32>
    %cst = arith.constant 0.000000e+00 : f32
    %18 = vector.broadcast %cst : f32 to vector<1x5xf32>
    %19 = arith.maximumf %17, %18 : vector<1x5xf32>
    %c0_12 = arith.constant 0 : index
    %c0_13 = arith.constant 0 : index
    %20 = vector.load %arg3[%c0_12, %c0_13] : memref<1x5xf32, #tpu.memory_space<vmem>>, vector<1x5xf32>
    tpu.vector_store %arg3[%c0_12, %c0_13], %19 {strides = array<i32>} : memref<1x5xf32, #tpu.memory_space<vmem>>, vector<1x5xf32>,
    return
  }
}

</mosaic_0001>

<llo_original>
// kernel: linear_add_relu.1
$region0: #{linear_add_relu.1}
  #allocation0 [shape = 'u32[]', space=smem, size = 0x4, offset = 0x4, fixed_abs, tag = 'smem constant byte address 0x4 - core index']
  #allocation1 [shape = 'u32[144,128]{1,0:T(1,128)}', space=vmem, size = 0x12000, scoped, tag = 'internal scratch']
  %s0 = inlined_call_operand.hbm [shape: f32[1,3], index: 0, kind: input, shape index: {}]
  %s1 = inlined_call_operand.hbm [shape: f32[4,5], index: 1, kind: input, shape index: {}]
  %s2 = inlined_call_operand.vmem [shape: f32[1,5], index: 2, kind: input, shape index: {}]
  %s3 = inlined_call_operand.hbm [shape: f32[1,5], index: 3, kind: output, shape index: {}]
  %s4 = sld [smem:[#allocation0]]
  $region30: #{linear_add_relu.1} parent=0
    _
  %s6 = ssub.s32 1, %s4
  %s7 = scalar_select 0, %s6, %s4
  $region1: #{linear_add_relu.1} parent=0
    #allocation2 [shape = 'u8[512]{0}', space=smem, size = 0x200, scoped, tag = 'input window, operand 0, single buffered']
    #allocation3 [shape = 's32[1]{0}', space=sflag, size = 0x4, scoped, tag = 'scoped memory for linear_add_relu.1']
    #allocation4 [shape = 's32[1]{0}', space=sflag, size = 0x4, scoped, tag = 'scoped memory for linear_add_relu.1']
    #allocation5 [shape = 's32[1]{0}', space=sflag, size = 0x4, scoped, tag = 'scoped memory for linear_add_relu.1']
    #allocation6 [shape = 'u8[2048]{0}', space=vmem, size = 0x800, scoped, tag = 'input window, operand 1, single buffered']
    #allocation7 [shape = 'u8[512]{0}', space=vmem, size = 0x400, scoped, tag = 'output window, operand 0, single buffered']
    %8 = vsyncpa [#allocation5], 0
    %9 = vsyncpa [#allocation3], 0
    %10 = vsyncpa [#allocation4], 0
    // Predicated region
    $region2: #{linear_add_relu.1} parent=1 // pred_check
      _
    $region3: #{linear_add_relu.1} parent=1 // pred_check_branch
      %12 = sbr.rel (0) target = $region5
    $region4: #{linear_add_relu.1} parent=1 // pred_region
      %s14 = ssub.s32 16, 16
      %15 = vsyncadd [#allocation5], %s14
      %18 = dma.hbm_to_smem %s0, 16, [#allocation2], [#allocation5]
    $region5: #{linear_add_relu.1} parent=1 // pred_fallthru
      _
    // Predicated region
    $region6: #{linear_add_relu.1} parent=1 // pred_check
      _
    $region7: #{linear_add_relu.1} parent=1 // pred_check_branch
      %20 = sbr.rel (0) target = $region9
    $region8: #{linear_add_relu.1} parent=1 // pred_region
      %s22 = ssub.s32 64, 64
      %23 = vsyncadd [#allocation3], %s22
      %s25 = sshll.u32 [#allocation6], 4
      %s26 = int_to_ptr.vmem [resolvable:$true] %s25
      %28 = dma.hbm_to_vmem [thread:$0]  %s1, 64, %s26, [#allocation3]
    $region9: #{linear_add_relu.1} parent=1 // pred_fallthru
      _
    // Predicated region
    $region10: #{linear_add_relu.1} parent=1 // pred_check
      _
    $region11: #{linear_add_relu.1} parent=1 // pred_check_branch
      %30 = sbr.rel (0) target = $region13
    $region12: #{linear_add_relu.1} parent=1 // pred_region
      _
    $region13: #{linear_add_relu.1} parent=1 // pred_fallthru
      _
    // Predicated region
    $region14: #{linear_add_relu.1} parent=1 // pred_check
      _
    $region15: #{linear_add_relu.1} parent=1 // pred_check_branch
      %32 = sbr.rel (0) target = $region17
    $region16: #{linear_add_relu.1} parent=1 // pred_region
      %33 = dma.done [#allocation5], 16
    $region17: #{linear_add_relu.1} parent=1 // pred_fallthru
      _
    // Predicated region
    $region18: #{linear_add_relu.1} parent=1 // pred_check
      _
    $region19: #{linear_add_relu.1} parent=1 // pred_check_branch
      %35 = sbr.rel (0) target = $region21
    $region20: #{linear_add_relu.1} parent=1 // pred_region
      %36 = dma.done [#allocation3], 64
    $region21: #{linear_add_relu.1} parent=1 // pred_fallthru
      _
    %37 = sfence
    %v38 = vld [vmem:[#allocation6 + $0x3] sm:$0x1]
    %v39 = vld [vmem:[%s2] sm:$0x1]
    %v40 = vadd.f32 %v38, %v39
    %s41 = sld [smem:[#allocation2]]
    %v42 = vld [vmem:[#allocation6] sm:$0x1]
    %v43 = vstv %s41
    %v44 = vmul.f32 %v43, %v42
    %v45 = vadd.f32 %v40, %v44
    %s46 = sld [smem:[#allocation2 + $0x1]]
    %v47 = vld [vmem:[#allocation6 + $0x1] sm:$0x1]
    %v48 = vstv %s46
    %v49 = vmul.f32 %v48, %v47
    %v50 = vadd.f32 %v45, %v49
    %s51 = sld [smem:[#allocation2 + $0x2]]
    %v52 = vld [vmem:[#allocation6 + $0x2] sm:$0x1]
    %v53 = vstv %s51
    %v54 = vmul.f32 %v53, %v52
    %v55 = vadd.f32 %v50, %v54
    %v56 = vmax.f32 %v55, 0.0
    %vm57 = vcmask 32768
    %58 = vst.msk [vmem:[#allocation7] sm:$0x1] %vm57, %v56
    // Predicated region
    $region22: #{linear_add_relu.1} parent=1 // pred_check
      _
    $region23: #{linear_add_relu.1} parent=1 // pred_check_branch
      %60 = sbr.rel (0) target = $region25
    $region24: #{linear_add_relu.1} parent=1 // pred_region
      %s62 = ssub.s32 16, 16
      %63 = vsyncadd [#allocation4], %s62
      %s65 = sshll.u32 [#allocation7], 4
      %s66 = int_to_ptr.vmem [resolvable:$true] %s65
      %68 = dma.vmem_to_hbm [thread:$0]  %s66, 16, %s3, [#allocation4]
    $region25: #{linear_add_relu.1} parent=1 // pred_fallthru
      _
    // Predicated region
    $region26: #{linear_add_relu.1} parent=1 // pred_check
      _
    $region27: #{linear_add_relu.1} parent=1 // pred_check_branch
      %70 = sbr.rel (0) target = $region29
    $region28: #{linear_add_relu.1} parent=1 // pred_region
      %71 = dma.done [#allocation4], 16
    $region29: #{linear_add_relu.1} parent=1 // pred_fallthru
      _
    %72 = vsyncpa [#allocation3], 1
    %73 = vsyncpa [#allocation4], 1
    %74 = vsyncpa [#allocation5], 1

</llo_original>
